<compile_context>
chip_gen: v5e
topology: v5e:2x2
jax: 0.10.0
libtpu: 0.0.40
codegen_flags: <defaults>
</compile_context>

<pallas_src>
import jax
import jax.numpy as jnp
from jax.experimental import pallas as pl
from jax.experimental.pallas import tpu as pltpu

EPS = 1e-5
NEG_SLOPE = 0.2


def _lrelu(x):
    return jnp.where(x >= 0, x, NEG_SLOPE * x)


# ---------------------------------------------------------------------------
# Stage 1: per-batch-element BatchNorm statistics.
#   Reads an x tile (C, tile_p), computes h2 = conv2(lrelu(conv1(x))) on the fly
#   and accumulates per-channel sum / sum-of-squares; h2 never touches HBM.
# ---------------------------------------------------------------------------
def stats_kernel(x_ref, w1_ref, b1_ref, w2_ref, ssum_ref, ssq_ref):
    @pl.when(pl.program_id(1) == 0)
    def _():
        ssum_ref[...] = jnp.zeros_like(ssum_ref)
        ssq_ref[...] = jnp.zeros_like(ssq_ref)

    h1 = _lrelu(
        jnp.dot(w1_ref[...], x_ref[...], preferred_element_type=jnp.float32)
        + b1_ref[...]
    )                                                                   # (nf,  tile_p)
    h2 = jnp.dot(w2_ref[...], h1, preferred_element_type=jnp.float32)   # (nf2, tile_p)

    ssum_ref[...] += jnp.sum(h2, axis=1, keepdims=True)
    ssq_ref[...] += jnp.sum(h2 * h2, axis=1, keepdims=True)


# ---------------------------------------------------------------------------
# Stage 2: recompute h2 from x, apply folded BatchNorm (scale/shift), LeakyReLU,
#          then conv3.  Output is produced and stored lane-dense along pixels.
# ---------------------------------------------------------------------------
def apply_kernel(x_ref, w1_ref, b1_ref, w2_ref, scale_ref, shift_ref, w3_ref,
                 out_ref):
    h1 = _lrelu(
        jnp.dot(w1_ref[...], x_ref[...], preferred_element_type=jnp.float32)
        + b1_ref[...]
    )
    h2 = jnp.dot(w2_ref[...], h1, preferred_element_type=jnp.float32)   # (nf2, tile_p)
    h3 = _lrelu(h2 * scale_ref[...] + shift_ref[...])
    # conv3 (2nf -> 1): sublane reduction keeps the result (1, tile_p) lane-dense.
    out_ref[...] = jnp.sum(w3_ref[...] * h3, axis=0, keepdims=True)


# ---------------------------------------------------------------------------
# Wrapper
# ---------------------------------------------------------------------------
def pixel_discriminator(x_nchw, params, *, max_tile_p=2048):
    w1, b1, w2, gamma, beta, w3 = params
    N, C, H, W = x_nchw.shape
    HW = H * W
    nf = w1.shape[0]
    nf2 = w2.shape[0]
    assert w2.shape[1] == C and C == nf, \
        "module's conv2 takes 输入的通道数 channels => forward only valid when C == nf"
    assert w3.shape == (1, nf2)

    tile_p = HW if HW <= max_tile_p else max_tile_p
    assert HW % tile_p == 0, "demo assumes H*W divisible by the pixel tile"
    n_tiles = HW // tile_p
    grid = (N, n_tiles)

    # Natural NCHW layout (pure metadata reshape; no transpose anywhere).
    x = x_nchw.reshape(N, C, HW).astype(jnp.float32)
    w1f = w1.astype(jnp.float32)                         # (nf,  C)
    b1c = b1.reshape(nf, 1).astype(jnp.float32)          # (nf,  1)
    w2f = w2.astype(jnp.float32)                         # (nf2, C)
    w3c = w3.reshape(nf2, 1).astype(jnp.float32)         # (nf2, 1)

    def weight_spec(shape):
        return pl.BlockSpec(shape, lambda n, i: (0, 0))

    ssum_n, ssq_n = pl.pallas_call(
        stats_kernel,
        out_shape=(
            jax.ShapeDtypeStruct((N, nf2, 1), jnp.float32),
            jax.ShapeDtypeStruct((N, nf2, 1), jnp.float32),
        ),
        grid_spec=pltpu.PrefetchScalarGridSpec(
            num_scalar_prefetch=0,
            grid=grid,
            in_specs=[
                pl.BlockSpec((None, C, tile_p), lambda n, i: (n, 0, i)),
                weight_spec((nf, C)),
                weight_spec((nf, 1)),
                weight_spec((nf2, C)),
            ],
            out_specs=[
                pl.BlockSpec((None, nf2, 1), lambda n, i: (n, 0, 0)),
                pl.BlockSpec((None, nf2, 1), lambda n, i: (n, 0, 0)),
            ],
        ),
        compiler_params=pltpu.CompilerParams(
            dimension_semantics=("parallel", "arbitrary")),
    )(x, w1f, b1c, w2f)

    # Fold BatchNorm (training-mode batch stats, biased variance) into per-channel
    # scale/shift once, in plain JAX, instead of redoing the math every tile.
    count = jnp.float32(N * HW)
    mean = jnp.sum(ssum_n, axis=0) / count                     # (nf2, 1)
    var = jnp.sum(ssq_n, axis=0) / count - mean * mean
    var = jnp.maximum(var, 0.0)                                # E[x^2]-E[x]^2 guard
    inv = jax.lax.rsqrt(var + EPS)
    scale = gamma.reshape(nf2, 1).astype(jnp.float32) * inv    # (nf2, 1)
    shift = beta.reshape(nf2, 1).astype(jnp.float32) - mean * scale

    out = pl.pallas_call(
        apply_kernel,
        out_shape=jax.ShapeDtypeStruct((N, 1, HW), jnp.float32),
        grid_spec=pltpu.PrefetchScalarGridSpec(
            num_scalar_prefetch=0,
            grid=grid,
            in_specs=[
                pl.BlockSpec((None, C, tile_p), lambda n, i: (n, 0, i)),
                weight_spec((nf, C)),
                weight_spec((nf, 1)),
                weight_spec((nf2, C)),
                weight_spec((nf2, 1)),
                weight_spec((nf2, 1)),
                weight_spec((nf2, 1)),
            ],
            out_specs=pl.BlockSpec((None, 1, tile_p), lambda n, i: (n, 0, i)),
        ),
        compiler_params=pltpu.CompilerParams(
            dimension_semantics=("parallel", "parallel")),
    )(x, w1f, b1c, w2f, scale, shift, w3c)

    return out.reshape(N, 1, H, W)


# ---------------------------------------------------------------------------
# Pure-JAX reference (exact forward semantics) for verification.
# ---------------------------------------------------------------------------
def reference(x_nchw, params):
    w1, b1, w2, gamma, beta, w3 = params
    N, C, H, W = x_nchw.shape
    xm = jnp.transpose(x_nchw, (0, 2, 3, 1)).reshape(-1, C)
    h1 = _lrelu(xm @ w1.T + b1)
    h2 = h1 @ w2.T
    mean = jnp.mean(h2, axis=0)
    var = jnp.var(h2, axis=0)                       # biased, like BN training mode
    y = gamma * (h2 - mean) / jnp.sqrt(var + EPS) + beta
    out = _lrelu(y) @ w3.T
    return jnp.transpose(out.reshape(N, H, W, 1), (0, 3, 1, 2))


if __name__ == "__main__":
    # 输入的通道数 = 8, 过滤器数量 = 8 (must match: conv2 declares in_channels =
    # 输入的通道数), so 2*nf = 16.
    N, C, H, W = 2, 8, 16, 16
    NF, NF2 = 8, 16

    key = jax.random.PRNGKey(0)
    k = jax.random.split(key, 7)
    # PyTorch conv weight (out, in, 1, 1) stored squeezed as (out, in) — used directly.
    w1 = jax.random.normal(k[0], (NF, C), jnp.float32) * 0.1
    b1 = jax.random.normal(k[1], (NF,), jnp.float32) * 0.1
    w2 = jax.random.normal(k[2], (NF2, C), jnp.float32) * 0.1            # bias=False
    gamma = 1.0 + jax.random.normal(k[3], (NF2,), jnp.float32) * 0.1     # BN weight
    beta = jax.random.normal(k[4], (NF2,), jnp.float32) * 0.1            # BN bias
    w3 = jax.random.normal(k[5], (1, NF2), jnp.float32) * 0.1            # bias=False
    params = (w1, b1, w2, gamma, beta, w3)

    x = jax.random.normal(k[6], (N, C, H, W), jnp.float32)

    out = jax.block_until_ready(pixel_discriminator(x, params))
    ref = reference(x, params)

    assert out.shape == (N, 1, H, W), out.shape
    err = float(jnp.max(jnp.abs(out - ref)))
    assert jnp.allclose(out, ref, atol=1e-4, rtol=1e-4), err

    # TODO(synk): BatchNorm running_mean/running_var bookkeeping (training-side
    # state update) is not reproduced; it does not affect the forward output.
    print("KERNEL_OK")
</pallas_src>

<mosaic_0001>
module attributes {stable_mosaic.version = 11 : i64} {
  func.func @stats_kernel(%arg0: i32, %arg1: i32, %arg2: memref<1x8x256xf32, #tpu.memory_space<vmem>>, %arg3: memref<8x8xf32, #tpu.memory_space<vmem>>, %arg4: memref<8x1xf32, #tpu.memory_space<vmem>>, %arg5: memref<16x8xf32, #tpu.memory_space<vmem>>, %arg6: memref<1x16x1xf32, #tpu.memory_space<vmem>>, %arg7: memref<1x16x1xf32, #tpu.memory_space<vmem>>) attributes {dimension_semantics = [#tpu.dimension_semantics<parallel>, #tpu.dimension_semantics<arbitrary>], iteration_bounds = array<i64: 2, 1>, scalar_prefetch = 0 : i64, scratch_operands = 0 : i64, tpu.core_type = #tpu.core_type<tc>, window_params = [{transform_indices = @transform_0, window_bounds = array<i64: 1, 8, 256>}, {pipeline_mode = #tpu.pipeline_mode<synchronous>, transform_indices = @transform_1, window_bounds = array<i64: 8, 8>}, {pipeline_mode = #tpu.pipeline_mode<synchronous>, transform_indices = @transform_2, window_bounds = array<i64: 8, 1>}, {pipeline_mode = #tpu.pipeline_mode<synchronous>, transform_indices = @transform_3, window_bounds = array<i64: 16, 8>}, {transform_indices = @transform_4, window_bounds = array<i64: 1, 16, 1>}, {transform_indices = @transform_5, window_bounds = array<i64: 1, 16, 1>}]} {
    %c0_i32 = arith.constant 0 : i32
    %0 = arith.cmpi eq, %arg1, %c0_i32 : i32
    %1 = arith.extui %0 : i1 to i32
    %c0_i32_0 = arith.constant 0 : i32
    %2 = arith.cmpi ne, %1, %c0_i32_0 : i32
    scf.if %2 {
      %cst_26 = arith.constant 0.000000e+00 : f32
      %34 = vector.broadcast %cst_26 : f32 to vector<16x1xf32>
      %c0_27 = arith.constant 0 : index
      %c0_28 = arith.constant 0 : index
      %c0_29 = arith.constant 0 : index
      %35 = vector.load %arg6[%c0_27, %c0_28, %c0_29] : memref<1x16x1xf32, #tpu.memory_space<vmem>>, vector<1x16x1xf32>
      %36 = vector.shape_cast %35 : vector<1x16x1xf32> to vector<16x1xf32>
      %37 = vector.shape_cast %34 : vector<16x1xf32> to vector<1x16x1xf32>
      tpu.vector_store %arg6[%c0_27, %c0_28, %c0_29], %37 {strides = array<i32>} : memref<1x16x1xf32, #tpu.memory_space<vmem>>, vector<1x16x1xf32>,
      %cst_30 = arith.constant 0.000000e+00 : f32
      %38 = vector.broadcast %cst_30 : f32 to vector<16x1xf32>
      %c0_31 = arith.constant 0 : index
      %c0_32 = arith.constant 0 : index
      %c0_33 = arith.constant 0 : index
      %39 = vector.load %arg7[%c0_31, %c0_32, %c0_33] : memref<1x16x1xf32, #tpu.memory_space<vmem>>, vector<1x16x1xf32>
      %40 = vector.shape_cast %39 : vector<1x16x1xf32> to vector<16x1xf32>
      %41 = vector.shape_cast %38 : vector<16x1xf32> to vector<1x16x1xf32>
      tpu.vector_store %arg7[%c0_31, %c0_32, %c0_33], %41 {strides = array<i32>} : memref<1x16x1xf32, #tpu.memory_space<vmem>>, vector<1x16x1xf32>,
    } else {
    }
    %c0 = arith.constant 0 : index
    %c0_1 = arith.constant 0 : index
    %3 = vector.load %arg3[%c0, %c0_1] : memref<8x8xf32, #tpu.memory_space<vmem>>, vector<8x8xf32>
    %c0_2 = arith.constant 0 : index
    %c0_3 = arith.constant 0 : index
    %c0_4 = arith.constant 0 : index
    %4 = vector.load %arg2[%c0_2, %c0_3, %c0_4] : memref<1x8x256xf32, #tpu.memory_space<vmem>>, vector<1x8x256xf32>
    %5 = vector.shape_cast %4 : vector<1x8x256xf32> to vector<8x256xf32>
    %cst = arith.constant dense<0.000000e+00> : vector<8x256xf32>
    %6 = tpu.matmul %3, %5, %cst {dimension_numbers = #tpu.dot_dimension_numbers<[1], [0], [0], [1], [0, 0, 1, 1], [], []>} : vector<8x8xf32>, vector<8x256xf32>, vector<8x256xf32> -> vector<8x256xf32>
    %c0_5 = arith.constant 0 : index
    %c0_6 = arith.constant 0 : index
    %7 = vector.load %arg4[%c0_5, %c0_6] : memref<8x1xf32, #tpu.memory_space<vmem>>, vector<8x1xf32>
    %8 = vector.broadcast %7 : vector<8x1xf32> to vector<8x256xf32>
    %9 = arith.addf %6, %8 : vector<8x256xf32>
    %cst_7 = arith.constant 0.000000e+00 : f32
    %10 = vector.broadcast %cst_7 : f32 to vector<8x256xf32>
    %11 = arith.cmpf oge, %9, %10 : vector<8x256xf32>
    %cst_8 = arith.constant 2.000000e-01 : f32
    %12 = vector.broadcast %cst_8 : f32 to vector<8x256xf32>
    %13 = arith.mulf %12, %9 : vector<8x256xf32>
    %14 = arith.select %11, %9, %13 : vector<8x256xi1>, vector<8x256xf32>
    %c0_9 = arith.constant 0 : index
    %c0_10 = arith.constant 0 : index
    %15 = vector.load %arg5[%c0_9, %c0_10] : memref<16x8xf32, #tpu.memory_space<vmem>>, vector<16x8xf32>
    %cst_11 = arith.constant dense<0.000000e+00> : vector<16x256xf32>
    %16 = tpu.matmul %15, %14, %cst_11 {dimension_numbers = #tpu.dot_dimension_numbers<[1], [0], [0], [1], [0, 0, 1, 1], [], []>} : vector<16x8xf32>, vector<8x256xf32>, vector<16x256xf32> -> vector<16x256xf32>
    %c0_12 = arith.constant 0 : index
    %c0_13 = arith.constant 0 : index
    %c0_14 = arith.constant 0 : index
    %17 = vector.load %arg6[%c0_12, %c0_13, %c0_14] : memref<1x16x1xf32, #tpu.memory_space<vmem>>, vector<1x16x1xf32>
    %18 = vector.shape_cast %17 : vector<1x16x1xf32> to vector<16x1xf32>
    %cst_15 = arith.constant dense<0.000000e+00> : vector<16xf32>
    %19 = vector.multi_reduction <add>, %16, %cst_15 [1] : vector<16x256xf32> to vector<16xf32>
    %20 = vector.shape_cast %19 : vector<16xf32> to vector<16x1xf32>
    %21 = arith.addf %18, %20 : vector<16x1xf32>
    %c0_16 = arith.constant 0 : index
    %c0_17 = arith.constant 0 : index
    %c0_18 = arith.constant 0 : index
    %22 = vector.load %arg6[%c0_16, %c0_17, %c0_18] : memref<1x16x1xf32, #tpu.memory_space<vmem>>, vector<1x16x1xf32>
    %23 = vector.shape_cast %22 : vector<1x16x1xf32> to vector<16x1xf32>
    %24 = vector.shape_cast %21 : vector<16x1xf32> to vector<1x16x1xf32>
    tpu.vector_store %arg6[%c0_16, %c0_17, %c0_18], %24 {strides = array<i32>} : memref<1x16x1xf32, #tpu.memory_space<vmem>>, vector<1x16x1xf32>,
    %c0_19 = arith.constant 0 : index
    %c0_20 = arith.constant 0 : index
    %c0_21 = arith.constant 0 : index
    %25 = vector.load %arg7[%c0_19, %c0_20, %c0_21] : memref<1x16x1xf32, #tpu.memory_space<vmem>>, vector<1x16x1xf32>
    %26 = vector.shape_cast %25 : vector<1x16x1xf32> to vector<16x1xf32>
    %27 = arith.mulf %16, %16 : vector<16x256xf32>
    %cst_22 = arith.constant dense<0.000000e+00> : vector<16xf32>
    %28 = vector.multi_reduction <add>, %27, %cst_22 [1] : vector<16x256xf32> to vector<16xf32>
    %29 = vector.shape_cast %28 : vector<16xf32> to vector<16x1xf32>
    %30 = arith.addf %26, %29 : vector<16x1xf32>
    %c0_23 = arith.constant 0 : index
    %c0_24 = arith.constant 0 : index
    %c0_25 = arith.constant 0 : index
    %31 = vector.load %arg7[%c0_23, %c0_24, %c0_25] : memref<1x16x1xf32, #tpu.memory_space<vmem>>, vector<1x16x1xf32>
    %32 = vector.shape_cast %31 : vector<1x16x1xf32> to vector<16x1xf32>
    %33 = vector.shape_cast %30 : vector<16x1xf32> to vector<1x16x1xf32>
    tpu.vector_store %arg7[%c0_23, %c0_24, %c0_25], %33 {strides = array<i32>} : memref<1x16x1xf32, #tpu.memory_space<vmem>>, vector<1x16x1xf32>,
    return
  }
  func.func @transform_0(%arg0: i32, %arg1: i32) -> (i32, i32, i32) {
    %c0_i32 = arith.constant 0 : i32
    %c0_i32_0 = arith.constant 0 : i32
    return %arg0, %c0_i32, %arg1 : i32, i32, i32
  }
  func.func @transform_1(%arg0: i32, %arg1: i32) -> (i32, i32) {
    %c0_i32 = arith.constant 0 : i32
    %c0_i32_0 = arith.constant 0 : i32
    %c0_i32_1 = arith.constant 0 : i32
    return %c0_i32, %c0_i32_0 : i32, i32
  }
  func.func @transform_2(%arg0: i32, %arg1: i32) -> (i32, i32) {
    %c0_i32 = arith.constant 0 : i32
    %c0_i32_0 = arith.constant 0 : i32
    %c0_i32_1 = arith.constant 0 : i32
    return %c0_i32, %c0_i32_0 : i32, i32
  }
  func.func @transform_3(%arg0: i32, %arg1: i32) -> (i32, i32) {
    %c0_i32 = arith.constant 0 : i32
    %c0_i32_0 = arith.constant 0 : i32
    %c0_i32_1 = arith.constant 0 : i32
    return %c0_i32, %c0_i32_0 : i32, i32
  }
  func.func @transform_4(%arg0: i32, %arg1: i32) -> (i32, i32, i32) {
    %c0_i32 = arith.constant 0 : i32
    %c0_i32_0 = arith.constant 0 : i32
    %c0_i32_1 = arith.constant 0 : i32
    return %arg0, %c0_i32, %c0_i32_0 : i32, i32, i32
  }
  func.func @transform_5(%arg0: i32, %arg1: i32) -> (i32, i32, i32) {
    %c0_i32 = arith.constant 0 : i32
    %c0_i32_0 = arith.constant 0 : i32
    %c0_i32_1 = arith.constant 0 : i32
    return %arg0, %c0_i32, %c0_i32_0 : i32, i32, i32
  }
}

</mosaic_0001>

<llo_original>
// kernel: tpu_custom_call.1
$region0: #{tpu_custom_call.1}
  #allocation0 [shape = 'u32[]', space=smem, size = 0x4, offset = 0x4, fixed_abs, tag = 'smem constant byte address 0x4 - core index']
  #allocation1 [shape = 'u32[72,128]{1,0:T(1,128)}', space=vmem, size = 0x9000, scoped, tag = 'internal scratch']
  %s0 = inlined_call_operand.hbm [shape: f32[2,8,256], index: 0, kind: input, shape index: {}]
  %s1 = inlined_call_operand.vmem [shape: f32[8,8], index: 1, kind: input, shape index: {}]
  %s2 = inlined_call_operand.vmem [shape: f32[8,1], index: 2, kind: input, shape index: {}]
  %s3 = inlined_call_operand.vmem [shape: f32[16,8], index: 3, kind: input, shape index: {}]
  %s4 = inlined_call_operand.vmem [shape: f32[2,16,1], index: 4, kind: output, shape index: {0}]
  %s5 = inlined_call_operand.vmem [shape: f32[2,16,1], index: 5, kind: output, shape index: {1}]
  %6 = xla_tuple %s4, %s5
  %s7 = sld [smem:[#allocation0]]
  $region65: #{tpu_custom_call.1} parent=0
    _
  %s9 = ssub.s32 1, %s7
  %s10 = scalar_select 0, %s9, %s7
  $region1: #{tpu_custom_call.1} parent=0
    #allocation2 [shape = 'u8[16384]{0}', space=vmem, size = 0x4000, scoped, tag = 'input window, operand 0']
    #allocation3 [shape = 's32[2]{0}', space=sflag, size = 0x8, scoped, tag = 'scoped memory for tpu_custom_call.1']
    %11 = vsyncpa [#allocation3], 0
    %s12 = scalar_lea.sflag [#allocation3], 1
    %13 = vsyncpa %s12, 0
    loop: start=0, step=1, limit=4
    $region2: #{tpu_custom_call.1} parent=1 // loop_pre_header
      _
    $region3: #{tpu_custom_call.1} parent=1 // loop_header
      %s15 = sphi 0, %s19
      %p16 = scmp.ge.s32.totalorder %s15, 4
      %s22 = sphi 0, %s34
      %s23 = sphi 0, %s30
      %s24 = sphi 0, %s22
      %s25 = sphi 0, %s23
      %s26 = sphi 0, %s24
      %s27 = sphi 0, %s25
      %s39 = sphi 0, %s41
      %s42 = sphi 0, %s39
      %s43 = sphi 0, %s42
      %s59 = sphi 0, %s43
      %s63 = sphi 0, %s63
      %s65 = sphi 0, %s63
      %s66 = sphi 0, %s65
      %s80 = sphi 0, %s66
      %s84 = sphi 0, %s84
      %s86 = sphi 0, %s84
      %s87 = sphi 0, %s86
      %s101 = sphi 0, %s87
      %s105 = sphi 0, %s105
      %s107 = sphi 0, %s105
      %s108 = sphi 0, %s107
      %s122 = sphi 0, %s108
      %s128 = sphi 0, %s130
      %s131 = sphi 0, %s128
      %s132 = sphi 0, %s131
      %s148 = sphi 0, %s132
      %s154 = sphi 0, %s156
      %s157 = sphi 0, %s154
      %s158 = sphi 0, %s157
      %s174 = sphi 0, %s158
    $region4: #{tpu_custom_call.1} parent=1 // loop_header_branch
      %18 = sbr.rel (%p16) target = $region8
    $region5: #{tpu_custom_call.1} parent=1 // loop_body
      %s20 = ssub.s32 %s15, 1
      %s21 = ssub.s32 %s15, 2
      %s28 = sadd.s32 1, %s23
      %p29 = scmp.ge.s32.totalorder %s28, 1
      %s30 = scalar_select %p29, 0, %s28
      %s31 = sadd.s32 1, %s22
      %s32 = scalar_select %p29, %s31, %s22
      %p33 = scmp.ge.s32.totalorder %s32, 2
      %s34 = scalar_select %p33, 0, %s32
      %s35 = ssub.s32 %s22, %s34
      %s36 = ssub.s32 %s23, %s30
      %s37 = sor.u32 %s35, %s36
      %p38 = scmp.eq.s32.totalorder %s37, 0
      %s40 = sadd.s32 %s39, 1
      %s41 = scalar_select %p38, %s39, %s40
      %p44 = pneg %p38
      %p45 = scmp.eq.s32.totalorder %s15, 1
      %p46 = por %p44, %p45
      %p47 = scmp.ne.s32.totalorder %s39, %s42
      %p48 = scmp.eq.s32.totalorder %s15, 0
      %p49 = por %p47, %p48
      %p50 = scmp.ne.s32.totalorder %s39, %s42
      %p51 = scmp.eq.s32.totalorder %s20, 1
      %p52 = por %p50, %p51
      %p53 = scmp.ne.s32.totalorder %s42, %s43
      %p54 = scmp.eq.s32.totalorder %s20, 0
      %p55 = por %p53, %p54
      %p56 = scmp.ne.s32.totalorder %s42, %s43
      %p57 = scmp.eq.s32.totalorder %s21, 1
      %p58 = por %p56, %p57
      %p60 = scmp.ne.s32.totalorder %s43, %s59
      %p61 = scmp.eq.s32.totalorder %s21, 0
      %p62 = por %p60, %p61
      %s64 = sadd.s32 %s63, 1
      %p67 = scmp.eq.s32.totalorder %s15, 1
      %p68 = scmp.ne.s32.totalorder %s63, %s65
      %p69 = scmp.eq.s32.totalorder %s15, 0
      %p70 = por %p68, %p69
      %p71 = scmp.ne.s32.totalorder %s63, %s65
      %p72 = scmp.eq.s32.totalorder %s20, 1
      %p73 = por %p71, %p72
      %p74 = scmp.ne.s32.totalorder %s65, %s66
      %p75 = scmp.eq.s32.totalorder %s20, 0
      %p76 = por %p74, %p75
      %p77 = scmp.ne.s32.totalorder %s65, %s66
      %p78 = scmp.eq.s32.totalorder %s21, 1
      %p79 = por %p77, %p78
      %p81 = scmp.ne.s32.totalorder %s66, %s80
      %p82 = scmp.eq.s32.totalorder %s21, 0
      %p83 = por %p81, %p82
      %s85 = sadd.s32 %s84, 1
      %p88 = scmp.eq.s32.totalorder %s15, 1
      %p89 = scmp.ne.s32.totalorder %s84, %s86
      %p90 = scmp.eq.s32.totalorder %s15, 0
      %p91 = por %p89, %p90
      %p92 = scmp.ne.s32.totalorder %s84, %s86
      %p93 = scmp.eq.s32.totalorder %s20, 1
      %p94 = por %p92, %p93
      %p95 = scmp.ne.s32.totalorder %s86, %s87
      %p96 = scmp.eq.s32.totalorder %s20, 0
      %p97 = por %p95, %p96
      %p98 = scmp.ne.s32.totalorder %s86, %s87
      %p99 = scmp.eq.s32.totalorder %s21, 1
      %p100 = por %p98, %p99
      %p102 = scmp.ne.s32.totalorder %s87, %s101
      %p103 = scmp.eq.s32.totalorder %s21, 0
      %p104 = por %p102, %p103
      %s106 = sadd.s32 %s105, 1
      %p109 = scmp.eq.s32.totalorder %s15, 1
      %p110 = scmp.ne.s32.totalorder %s105, %s107
      %p111 = scmp.eq.s32.totalorder %s15, 0
      %p112 = por %p110, %p111
      %p113 = scmp.ne.s32.totalorder %s105, %s107
      %p114 = scmp.eq.s32.totalorder %s20, 1
      %p115 = por %p113, %p114
      %p116 = scmp.ne.s32.totalorder %s107, %s108
      %p117 = scmp.eq.s32.totalorder %s20, 0
      %p118 = por %p116, %p117
      %p119 = scmp.ne.s32.totalorder %s107, %s108
      %p120 = scmp.eq.s32.totalorder %s21, 1
      %p121 = por %p119, %p120
      %p123 = scmp.ne.s32.totalorder %s108, %s122
      %p124 = scmp.eq.s32.totalorder %s21, 0
      %p125 = por %p123, %p124
      %s126 = ssub.s32 %s22, %s34
      %p127 = scmp.eq.s32.totalorder %s126, 0
      %s129 = sadd.s32 %s128, 1
      %s130 = scalar_select %p127, %s128, %s129
      %p133 = pneg %p127
      %p134 = scmp.eq.s32.totalorder %s15, 1
      %p135 = por %p133, %p134
      %p136 = scmp.ne.s32.totalorder %s128, %s131
      %p137 = scmp.eq.s32.totalorder %s15, 0
      %p138 = por %p136, %p137
      %p139 = scmp.ne.s32.totalorder %s128, %s131
      %p140 = scmp.eq.s32.totalorder %s20, 1
      %p141 = por %p139, %p140
      %p142 = scmp.ne.s32.totalorder %s131, %s132
      %p143 = scmp.eq.s32.totalorder %s20, 0
      %p144 = por %p142, %p143
      %p145 = scmp.ne.s32.totalorder %s131, %s132
      %p146 = scmp.eq.s32.totalorder %s21, 1
      %p147 = por %p145, %p146
      %p149 = scmp.ne.s32.totalorder %s132, %s148
      %p150 = scmp.eq.s32.totalorder %s21, 0
      %p151 = por %p149, %p150
      %s152 = ssub.s32 %s22, %s34
      %p153 = scmp.eq.s32.totalorder %s152, 0
      %s155 = sadd.s32 %s154, 1
      %s156 = scalar_select %p153, %s154, %s155
      %p159 = pneg %p153
      %p160 = scmp.eq.s32.totalorder %s15, 1
      %p161 = por %p159, %p160
      %p162 = scmp.ne.s32.totalorder %s154, %s157
      %p163 = scmp.eq.s32.totalorder %s15, 0
      %p164 = por %p162, %p163
      %p165 = scmp.ne.s32.totalorder %s154, %s157
      %p166 = scmp.eq.s32.totalorder %s20, 1
      %p167 = por %p165, %p166
      %p168 = scmp.ne.s32.totalorder %s157, %s158
      %p169 = scmp.eq.s32.totalorder %s20, 0
      %p170 = por %p168, %p169
      %p171 = scmp.ne.s32.totalorder %s157, %s158
      %p172 = scmp.eq.s32.totalorder %s21, 1
      %p173 = por %p171, %p172
      %p175 = scmp.ne.s32.totalorder %s158, %s174
      %p176 = scmp.eq.s32.totalorder %s21, 0
      %p177 = por %p175, %p176
      %p178 = scmp.le.s32.totalorder 1, %s15
      %p179 = scmp.lt.s32.totalorder %s15, 3
      %p180 = pnand %p178, %p179
      %p181 = pneg %p180
      // Predicated region
      $region9: #{tpu_custom_call.1} parent=5 // pred_check
        _
      $region10: #{tpu_custom_call.1} parent=5 // pred_check_branch
        %183 = sbr.rel (%p180) target = $region12
      $region11: #{tpu_custom_call.1} parent=5 // pred_region
        %s184 = ssub.s32 %s15, 1
        // Predicated region
        $region13: #{tpu_custom_call.1} parent=11 // pred_check
          %p185 = pneg %p76
        $region14: #{tpu_custom_call.1} parent=11 // pred_check_branch
          %187 = sbr.rel (%p185) target = $region16
        $region15: #{tpu_custom_call.1} parent=11 // pred_region
          _
        $region16: #{tpu_custom_call.1} parent=11 // pred_fallthru
          _
        // Predicated region
        $region17: #{tpu_custom_call.1} parent=11 // pred_check
          %p188 = pneg %p97
        $region18: #{tpu_custom_call.1} parent=11 // pred_check_branch
          %190 = sbr.rel (%p188) target = $region20
        $region19: #{tpu_custom_call.1} parent=11 // pred_region
          _
        $region20: #{tpu_custom_call.1} parent=11 // pred_fallthru
          _
        // Predicated region
        $region21: #{tpu_custom_call.1} parent=11 // pred_check
          %p191 = pneg %p118
        $region22: #{tpu_custom_call.1} parent=11 // pred_check_branch
          %193 = sbr.rel (%p191) target = $region24
        $region23: #{tpu_custom_call.1} parent=11 // pred_region
          _
        $region24: #{tpu_custom_call.1} parent=11 // pred_fallthru
          _
      $region12: #{tpu_custom_call.1} parent=5 // pred_fallthru
        _
      %p194 = scmp.lt.s32.totalorder %s15, 2
      // Predicated region
      $region25: #{tpu_custom_call.1} parent=5 // pred_check
        %p195 = pneg %p194
      $region26: #{tpu_custom_call.1} parent=5 // pred_check_branch
        %197 = sbr.rel (%p195) target = $region28
      $region27: #{tpu_custom_call.1} parent=5 // pred_region
        // Predicated region
        $region29: #{tpu_custom_call.1} parent=27 // pred_check
          %p198 = pneg %p49
        $region30: #{tpu_custom_call.1} parent=27 // pred_check_branch
          %200 = sbr.rel (%p198) target = $region32
        $region31: #{tpu_custom_call.1} parent=27 // pred_region
          %s201 = sand.u32 %s39, 1
          %s202 = scalar_lea.sflag [#allocation3], %s201
          %s203 = sand.u32 %s39, 1
          %s204 = smul.addr %s203, 16
          %s205 = scalar_lea.vmem [#allocation2], %s204
          %s206 = smul.u32 2, %s23
          %208 = vsyncadd %s202, 0
          %s209 = smul.addr %s22, 2
          %s210 = sadd.s32 %s206, %s209
          %s211 = smul.addr %s210, 8
          %s212 = scalar_lea.hbm %s0, %s211
          %s214 = sshll.u32 %s212, 4
          %s215 = int_to_ptr.hbm [resolvable:$true] %s214
          %s216 = sshll.u32 %s205, 4
          %s217 = int_to_ptr.vmem [resolvable:$true] %s216
          %219 = dma.hbm_to_vmem [thread:$0]  %s215, 256, %s217, %s202
        $region32: #{tpu_custom_call.1} parent=27 // pred_fallthru
          _
      $region28: #{tpu_custom_call.1} parent=5 // pred_fallthru
        _
      %p220 = scmp.le.s32.totalorder 1, %s15
      %p221 = scmp.lt.s32.totalorder %s15, 3
      %p222 = pnand %p220, %p221
      %p223 = pneg %p222
      // Predicated region
      $region33: #{tpu_custom_call.1} parent=5 // pred_check
        _
      $region34: #{tpu_custom_call.1} parent=5 // pred_check_branch
        %225 = sbr.rel (%p222) target = $region36
      $region35: #{tpu_custom_call.1} parent=5 // pred_region
        %s226 = ssub.s32 %s15, 1
        %s227 = sand.u32 %s42, 1
        %s228 = scalar_lea.sflag [#allocation3], %s227
        %s229 = sand.u32 %s42, 1
        %s230 = smul.addr %s229, 16
        %s231 = scalar_lea.vmem [#allocation2], %s230
        // Predicated region
        $region37: #{tpu_custom_call.1} parent=35 // pred_check
          %p232 = pneg %p55
        $region38: #{tpu_custom_call.1} parent=35 // pred_check_branch
          %234 = sbr.rel (%p232) target = $region40
        $region39: #{tpu_custom_call.1} parent=35 // pred_region
          %236 = dma.done %s228, 256
        $region40: #{tpu_custom_call.1} parent=35 // pred_fallthru
          _
        %s237 = sand.u32 %s42, 1
        %s238 = scalar_lea.sflag [#allocation3], %s237
        %s239 = sand.u32 %s42, 1
        %s240 = smul.addr %s239, 16
        %s241 = scalar_lea.vmem [#allocation2], %s240
        %p242 = pneg %p55
        %p243 = pneg %p52
        %p244 = pneg %p76
        %p245 = pneg %p73
        %p246 = pneg %p97
        %p247 = pneg %p94
        %p248 = pneg %p118
        %p249 = pneg %p115
        %p250 = pneg %p144
        %p251 = pneg %p141
        %p252 = scmp.lt.s32.totalorder %s24, 1
        %s253 = scalar_select %p252, %s24, 1
        %s254 = smul.addr %s253, 2
        %s255 = smul.addr %s254, 8
        %s256 = scalar_lea.vmem %s4, %s255
        %p257 = pneg %p170
        %p258 = pneg %p167
        %p259 = scmp.lt.s32.totalorder %s24, 1
        %s260 = scalar_select %p259, %s24, 1
        %s261 = smul.addr %s260, 2
        %s262 = smul.addr %s261, 8
        %s263 = scalar_lea.vmem %s5, %s262
        %s264 = smul.u32 2, %s25
        %p265 = scmp.lt.s32.totalorder %s24, 1
        %s266 = scalar_select %p265, %s24, 1
        %s267 = smul.addr %s266, 2
        %s268 = smul.addr %s267, 8
        %s269 = scalar_lea.vmem %s4, %s268
        %p270 = scmp.lt.s32.totalorder %s24, 1
        %s271 = scalar_select %p270, %s24, 1
        %s272 = smul.addr %s271, 2
        %s273 = smul.addr %s272, 8
        %s274 = scalar_lea.vmem %s5, %s273
        %p275 = scmp.eq.s32.totalorder %s25, 0
        // Predicated region
        $region41: #{tpu_custom_call.1} parent=35 // pred_check
          %p276 = pneg %p275
        $region42: #{tpu_custom_call.1} parent=35 // pred_check_branch
          %278 = sbr.rel (%p276) target = $region44
        $region43: #{tpu_custom_call.1} parent=35 // pred_region
          %vm279 = vcmask 7168
          %280 = vst.msk [vmem:[%s269] sm:$0xff] %vm279, 0.0
          %281 = vst.msk [vmem:[%s269 + $0x8] sm:$0xff] %vm279, 0.0
          %282 = vst.msk [vmem:[%s274] sm:$0xff] %vm279, 0.0
          %283 = vst.msk [vmem:[%s274 + $0x8] sm:$0xff] %vm279, 0.0
        $region44: #{tpu_custom_call.1} parent=35 // pred_fallthru
          _
        %v284 = vld [vmem:[%s1] sm:$0xff]
        %v285 = vld [vmem:[%s231] sm:$0xff]
        %v286 = vld [vmem:[%s231 + $0x8] sm:$0xff]
        %v287 = vld [vmem:[%s2] sm:$0xff]
        %289 = vset.pattern.permute.xlu0 0
        %290 = vperm.xlu0 %289, %v287
        %v291 = vpop.permute.xlu0 %290
        %vm293 = vcmask 64512
        %v295 = vsel %vm293, %v284, 0
        %297 = vmatpush.msra.mxu0 0.0
        %298 = vmatpush.msra.mxu0 0.0
        %299 = vmatpush.msra.mxu0 0.0
        %300 = vmatpush.msra.mxu0 0.0
        %301 = vmatpush.msra.mxu0 0.0
        %302 = vmatpush.msra.mxu0 0.0
        %303 = vmatpush.msra.mxu0 0.0
        %304 = vmatpush.msra.mxu0 0.0
        %305 = vmatpush.msra.mxu0 0.0
        %306 = vmatpush.msra.mxu0 0.0
        %307 = vmatpush.msra.mxu0 0.0
        %308 = vmatpush.msra.mxu0 0.0
        %309 = vmatpush.msra.mxu0 0.0
        %310 = vmatpush.msra.mxu0 0.0
        %311 = vmatpush.msra.mxu0 0.0
        %312 = vmatpush.msra.mxu0 %v285
        %313 = vmatmul.f32.gmra.mxu0 %v295
        %v314 = vpop.f32.mrf.mxu0
        %v315 = vadd.f32 %v291, %v314
        %316 = vdwg.mxu0
        %317 = vmatpush.msra.mxu0 0.0
        %318 = vmatpush.msra.mxu0 0.0
        %319 = vmatpush.msra.mxu0 0.0
        %320 = vmatpush.msra.mxu0 0.0
        %321 = vmatpush.msra.mxu0 0.0
        %322 = vmatpush.msra.mxu0 0.0
        %323 = vmatpush.msra.mxu0 0.0
        %324 = vmatpush.msra.mxu0 0.0
        %325 = vmatpush.msra.mxu0 0.0
        %326 = vmatpush.msra.mxu0 0.0
        %327 = vmatpush.msra.mxu0 0.0
        %328 = vmatpush.msra.mxu0 0.0
        %329 = vmatpush.msra.mxu0 0.0
        %330 = vmatpush.msra.mxu0 0.0
        %331 = vmatpush.msra.mxu0 0.0
        %332 = vmatpush.msra.mxu0 %v286
        %333 = vmatmul.f32.gmra.mxu0 %v295
        %v334 = vpop.f32.mrf.mxu0
        %v335 = vadd.f32 %v291, %v334
        %336 = vdwg.mxu0
        %vm337 = vcmp.ge.f32.partialorder %v315, 0.0
        %vm338 = vcmp.ge.f32.partialorder %v335, 0.0
        %v339 = vmul.f32 %v315, 0.2
        %v340 = vmul.f32 %v335, 0.2
        %v341 = vsel %vm337, %v315, %v339
        %v342 = vsel %vm338, %v335, %v340
        %v343 = vld [vmem:[%s3] sm:$0xff]
        %v344 = vld [vmem:[%s3 + $0x8] sm:$0xff]
        %v346 = vsel %vm293, %v343, 0
        %v349 = vsel %vm293, %v344, 0
        %351 = vmatpush.msra.mxu0 0.0
        %352 = vmatpush.msra.mxu0 0.0
        %353 = vmatpush.msra.mxu0 0.0
        %354 = vmatpush.msra.mxu0 0.0
        %355 = vmatpush.msra.mxu0 0.0
        %356 = vmatpush.msra.mxu0 0.0
        %357 = vmatpush.msra.mxu0 0.0
        %358 = vmatpush.msra.mxu0 0.0
        %359 = vmatpush.msra.mxu0 0.0
        %360 = vmatpush.msra.mxu0 0.0
        %361 = vmatpush.msra.mxu0 0.0
        %362 = vmatpush.msra.mxu0 0.0
        %363 = vmatpush.msra.mxu0 0.0
        %364 = vmatpush.msra.mxu0 0.0
        %365 = vmatpush.msra.mxu0 0.0
        %366 = vmatpush.msra.mxu0 %v341
        %367 = vmatmul.f32.gmra.mxu0 %v346
        %v368 = vpop.f32.mrf.mxu0
        %v369 = vadd.f32 0.0, %v368
        %370 = vmatmul.f32.gmra.mxu0 %v349
        %v371 = vpop.f32.mrf.mxu0
        %v372 = vadd.f32 0.0, %v371
        %373 = vdwg.mxu0
        %374 = vmatpush.msra.mxu0 0.0
        %375 = vmatpush.msra.mxu0 0.0
        %376 = vmatpush.msra.mxu0 0.0
        %377 = vmatpush.msra.mxu0 0.0
        %378 = vmatpush.msra.mxu0 0.0
        %379 = vmatpush.msra.mxu0 0.0
        %380 = vmatpush.msra.mxu0 0.0
        %381 = vmatpush.msra.mxu0 0.0
        %382 = vmatpush.msra.mxu0 0.0
        %383 = vmatpush.msra.mxu0 0.0
        %384 = vmatpush.msra.mxu0 0.0
        %385 = vmatpush.msra.mxu0 0.0
        %386 = vmatpush.msra.mxu0 0.0
        %387 = vmatpush.msra.mxu0 0.0
        %388 = vmatpush.msra.mxu0 0.0
        %389 = vmatpush.msra.mxu0 %v342
        %390 = vmatmul.f32.gmra.mxu0 %v346
        %v391 = vpop.f32.mrf.mxu0
        %v392 = vadd.f32 0.0, %v391
        %393 = vmatmul.f32.gmra.mxu0 %v349
        %v394 = vpop.f32.mrf.mxu0
        %v395 = vadd.f32 0.0, %v394
        %396 = vdwg.mxu0
        %v397 = vld [vmem:[%s269] sm:$0xff]
        %v398 = vld [vmem:[%s269 + $0x8] sm:$0xff]
        %v399 = vadd.f32 %v369, %v392
        %400 = vadd.xlane.f32.xlu0 %v399
        %v401 = vpop.xlane.xlu0 %400
        %v402 = vadd.f32 %v372, %v395
        %403 = vadd.xlane.f32.xlu0 %v402
        %v404 = vpop.xlane.xlu0 %403
        %v405 = vadd.f32 %v397, %v401
        %v406 = vadd.f32 %v398, %v404
        %vm407 = vcmask 7168
        %408 = vst.msk [vmem:[%s269] sm:$0xff] %vm407, %v405
        %409 = vst.msk [vmem:[%s269 + $0x8] sm:$0xff] %vm407, %v406
        %v410 = vld [vmem:[%s274] sm:$0xff]
        %v411 = vld [vmem:[%s274 + $0x8] sm:$0xff]
        %v412 = vmul.f32 %v369, %v369
        %v413 = vmul.f32 %v392, %v392
        %v414 = vmul.f32 %v372, %v372
        %v415 = vmul.f32 %v395, %v395
        %v416 = vadd.f32 %v412, %v413
        %417 = vadd.xlane.f32.xlu0 %v416
        %v418 = vpop.xlane.xlu0 %417
        %v419 = vadd.f32 %v414, %v415
        %420 = vadd.xlane.f32.xlu0 %v419
        %v421 = vpop.xlane.xlu0 %420
        %v422 = vadd.f32 %v410, %v418
        %v423 = vadd.f32 %v411, %v421
        %424 = vst.msk [vmem:[%s274] sm:$0xff] %vm407, %v422
        %425 = vst.msk [vmem:[%s274 + $0x8] sm:$0xff] %vm407, %v423
        %p426 = scmp.lt.s32.totalorder %s24, 1
        %s427 = scalar_select %p426, %s24, 1
        %s428 = smul.addr %s427, 2
        %s429 = smul.addr %s428, 8
        %s430 = scalar_lea.vmem %s4, %s429
        %p431 = scmp.lt.s32.totalorder %s24, 1
        %s432 = scalar_select %p431, %s24, 1
        %s433 = smul.addr %s432, 2
        %s434 = smul.addr %s433, 8
        %s435 = scalar_lea.vmem %s5, %s434
        // Predicated region
        $region45: #{tpu_custom_call.1} parent=35 // pred_check
          %p436 = pneg %p141
        $region46: #{tpu_custom_call.1} parent=35 // pred_check_branch
          %438 = sbr.rel (%p436) target = $region48
        $region47: #{tpu_custom_call.1} parent=35 // pred_region
          _
        $region48: #{tpu_custom_call.1} parent=35 // pred_fallthru
          _
        // Predicated region
        $region49: #{tpu_custom_call.1} parent=35 // pred_check
          %p439 = pneg %p167
        $region50: #{tpu_custom_call.1} parent=35 // pred_check_branch
          %441 = sbr.rel (%p439) target = $region52
        $region51: #{tpu_custom_call.1} parent=35 // pred_region
          _
        $region52: #{tpu_custom_call.1} parent=35 // pred_fallthru
          _
      $region36: #{tpu_custom_call.1} parent=5 // pred_fallthru
        _
      %p442 = scmp.le.s32.totalorder 2, %s15
      // Predicated region
      $region53: #{tpu_custom_call.1} parent=5 // pred_check
        %p443 = pneg %p442
      $region54: #{tpu_custom_call.1} parent=5 // pred_check_branch
        %445 = sbr.rel (%p443) target = $region56
      $region55: #{tpu_custom_call.1} parent=5 // pred_region
        %s446 = ssub.s32 %s15, 2
        // Predicated region
        $region57: #{tpu_custom_call.1} parent=55 // pred_check
          %p447 = pneg %p147
        $region58: #{tpu_custom_call.1} parent=55 // pred_check_branch
          %449 = sbr.rel (%p447) target = $region60
        $region59: #{tpu_custom_call.1} parent=55 // pred_region
          %p450 = scmp.lt.s32.totalorder %s26, 1
          %s451 = scalar_select %p450, %s26, 1
          %s452 = smul.addr %s451, 2
          %s453 = smul.addr %s452, 8
          %s454 = scalar_lea.vmem %s4, %s453
        $region60: #{tpu_custom_call.1} parent=55 // pred_fallthru
          _
        // Predicated region
        $region61: #{tpu_custom_call.1} parent=55 // pred_check
          %p455 = pneg %p173
        $region62: #{tpu_custom_call.1} parent=55 // pred_check_branch
          %457 = sbr.rel (%p455) target = $region64
        $region63: #{tpu_custom_call.1} parent=55 // pred_region
          %p458 = scmp.lt.s32.totalorder %s26, 1
          %s459 = scalar_select %p458, %s26, 1
          %s460 = smul.addr %s459, 2
          %s461 = smul.addr %s460, 8
          %s462 = scalar_lea.vmem %s5, %s461
        $region64: #{tpu_custom_call.1} parent=55 // pred_fallthru
          _
      $region56: #{tpu_custom_call.1} parent=5 // pred_fallthru
        _
    $region6: #{tpu_custom_call.1} parent=1 // loop_footer
      %s19 = sadd.s32 1, %s15
    $region7: #{tpu_custom_call.1} parent=1 // loop_footer_branch
      %14 = sbr.rel target = $region3
    $region8: #{tpu_custom_call.1} parent=1 // loop_exit
      _
    %463 = vsyncpa [#allocation3], 1
    %s464 = scalar_lea.sflag [#allocation3], 1
    %465 = vsyncpa %s464, 1

</llo_original>
